<compile_context>
chip_gen: v7x
topology: tpu7x:2x2x1
jax: 0.10.0
libtpu: 0.0.40
codegen_flags: <defaults>
</compile_context>

<pallas_src>
import functools

import jax
import jax.numpy as jnp
from jax.experimental import pallas as pl
from jax.experimental.pallas import tpu as pltpu


_MAX_ROW_TILE = 256      # multiple of 8 (sublane)
_MAX_LANE_TILE = 2048    # multiple of 128 (lane); >=512-wide tiles ~85% HBM roofline


def _dice_rows_kernel(yt_ref, yp_ref, out_ref, inter_acc, union_acc, *,
                      eps, p_total, tp, mask_cols):
    """Accumulate per-row intersection / union over spatial tiles; emit per-row
    dice loss (replicated across 128 lanes) on the last spatial grid step."""
    j = pl.program_id(1)

    @pl.when(j == 0)
    def _():
        inter_acc[...] = jnp.zeros_like(inter_acc)
        union_acc[...] = jnp.zeros_like(union_acc)

    # Load in native dtype, compute in f32.
    yt = yt_ref[...].astype(jnp.float32)
    yp = jax.nn.sigmoid(yp_ref[...].astype(jnp.float32))  # from_logits=True, binary

    if mask_cols:
        # Ragged last spatial tile: zero out the out-of-bounds columns so the
        # row sums are exact. (1, tp) mask broadcasts across the row tile.
        col = j * tp + jax.lax.broadcasted_iota(jnp.int32, (1, tp), 1)
        valid = col < p_total
        yt = jnp.where(valid, yt, 0.0)
        yp = jnp.where(valid, yp, 0.0)

    inter_acc[...] += jnp.sum(yt * yp, axis=1, keepdims=True)   # (TR, 1)
    union_acc[...] += jnp.sum(yt + yp, axis=1, keepdims=True)   # fused single reduce

    @pl.when(j == pl.num_programs(1) - 1)
    def _():
        dice = (2.0 * inter_acc[...] + eps) / (union_acc[...] + eps)
        dice = jnp.clip(dice, 0.0, 1.0)
        out_ref[...] = jnp.broadcast_to(1.0 - dice, out_ref.shape)


def dice_loss(y_true, y_pred, *, eps=1e-6, reduction='mean',
              max_row_tile=_MAX_ROW_TILE, max_lane_tile=_MAX_LANE_TILE):
    """Binary DiceLoss (num_classes=1, from_logits=True).

    y_true, y_pred: (N, C, H, W) arrays, any float dtype (bf16 recommended for
    HBM bandwidth). reduction in {'mean', 'sum', None}. Returns f32.
    """
    assert y_true.shape == y_pred.shape
    n, c, h, w = y_true.shape
    r, p = n * c, h * w

    # (N, C, H, W) -> (R, P); reshape of contiguous dims, no HBM copy.
    yt2 = y_true.reshape(r, p)
    yp2 = y_pred.reshape(r, p)

    # Tile selection: full-extent block when the dim is small (always legal),
    # otherwise a fixed (8,128)-aligned tile; ragged tails handled in-kernel.
    tr = r if r <= max_row_tile else max_row_tile
    tp = p if p <= max_lane_tile else max_lane_tile
    mask_cols = (p % tp) != 0

    grid = (pl.cdiv(r, tr), pl.cdiv(p, tp))
    kernel = functools.partial(_dice_rows_kernel, eps=eps, p_total=p, tp=tp,
                               mask_cols=mask_cols)

    per_row = pl.pallas_call(
        kernel,
        out_shape=jax.ShapeDtypeStruct((r, 128), jnp.float32),
        grid_spec=pltpu.PrefetchScalarGridSpec(
            num_scalar_prefetch=0,
            grid=grid,
            in_specs=[
                pl.BlockSpec((tr, tp), lambda i, j: (i, j)),
                pl.BlockSpec((tr, tp), lambda i, j: (i, j)),
            ],
            out_specs=pl.BlockSpec((tr, 128), lambda i, j: (i, 0)),
            scratch_shapes=[
                pltpu.VMEM((tr, 1), jnp.float32),   # intersection accumulator
                pltpu.VMEM((tr, 1), jnp.float32),   # union accumulator
            ],
        ),
        compiler_params=pltpu.CompilerParams(
            dimension_semantics=("parallel", "arbitrary"),
            vmem_limit_bytes=32 * 1024 * 1024,
        ),
    )(yt2, yp2)

    per_row_loss = per_row[:, 0]               # exactly R real rows, no padding
    if reduction == 'mean':
        return jnp.mean(per_row_loss)
    elif reduction == 'sum':
        return jnp.sum(per_row_loss)
    else:
        return per_row_loss.reshape(n, c)


def _dice_loss_ref(y_true, y_pred, *, eps=1e-6, reduction='mean'):
    # Pure-JAX reference mirroring the PyTorch module (binary case).
    yp = jax.nn.sigmoid(y_pred.astype(jnp.float32))
    yt = y_true.astype(jnp.float32)
    intersection = jnp.sum(yt * yp, axis=(2, 3))
    union = jnp.sum(yt, axis=(2, 3)) + jnp.sum(yp, axis=(2, 3))
    dice = (2.0 * intersection + eps) / (union + eps)
    dice = jnp.clip(dice, 0.0, 1.0)
    loss = 1.0 - dice
    if reduction == 'mean':
        return jnp.mean(loss)
    elif reduction == 'sum':
        return jnp.sum(loss)
    return loss


if __name__ == "__main__":
    key = jax.random.PRNGKey(0)

    def _run_case(case_key, shape, in_dtype, **kw):
        k1, k2 = jax.random.split(case_key)
        y_pred = jax.random.normal(k1, shape, dtype=jnp.float32).astype(in_dtype)  # logits
        y_true = (jax.random.uniform(k2, shape) > 0.5).astype(in_dtype)            # {0,1} mask
        loss = jax.block_until_ready(dice_loss(y_true, y_pred, **kw))
        ref = _dice_loss_ref(y_true, y_pred, reduction=kw.get('reduction', 'mean'))
        assert jnp.allclose(loss, ref, atol=2e-5, rtol=1e-4), (shape, loss, ref)
        return loss

    keys = jax.random.split(key, 5)
    _run_case(keys[0], (2, 1, 16, 16), jnp.bfloat16)                 # single-tile path, bf16 stream
    _run_case(keys[1], (3, 1, 64, 64), jnp.float32)                  # multi P-tile, exact column tiles
    _run_case(keys[2], (2, 1, 50, 50), jnp.bfloat16)                 # ragged last P-tile, in-kernel mask
    _run_case(keys[3], (10, 1, 8, 16), jnp.float32, max_row_tile=8)  # ragged last R-tile (OOB writes dropped)
    _run_case(keys[4], (2, 1, 16, 16), jnp.float32, reduction='sum') # reduction='sum' path

    # TODO(synk): multi-class branch (softmax + argmax one-hot) and the
    # host-side Logger warning are not implemented; module default is
    # num_classes=1 (binary), which is what this kernel covers.
    print("KERNEL_OK")
</pallas_src>

<mosaic_0001>
module attributes {stable_mosaic.version = 11 : i64} {
  func.func @_dice_rows_kernel(%arg0: i32, %arg1: i32, %arg2: memref<2x256xbf16, #tpu.memory_space<vmem>>, %arg3: memref<2x256xbf16, #tpu.memory_space<vmem>>, %arg4: memref<2x128xf32, #tpu.memory_space<vmem>>, %arg5: memref<2x1xf32, #tpu.memory_space<vmem>>, %arg6: memref<2x1xf32, #tpu.memory_space<vmem>>) attributes {dimension_semantics = [#tpu.dimension_semantics<parallel>, #tpu.dimension_semantics<arbitrary>], iteration_bounds = array<i64: 1, 1>, scalar_prefetch = 0 : i64, scratch_operands = 2 : i64, tpu.core_type = #tpu.core_type<tc>, window_params = [{transform_indices = @transform_0, window_bounds = array<i64: 2, 256>}, {transform_indices = @transform_1, window_bounds = array<i64: 2, 256>}, {transform_indices = @transform_2, window_bounds = array<i64: 2, 128>}]} {
    %c0_i32 = arith.constant 0 : i32
    %0 = arith.cmpi eq, %arg1, %c0_i32 : i32
    %1 = arith.extui %0 : i1 to i32
    %c0_i32_0 = arith.constant 0 : i32
    %2 = arith.cmpi ne, %1, %c0_i32_0 : i32
    scf.if %2 {
      %cst_16 = arith.constant 0.000000e+00 : f32
      %27 = vector.broadcast %cst_16 : f32 to vector<2x1xf32>
      %c0_17 = arith.constant 0 : index
      %c0_18 = arith.constant 0 : index
      %28 = vector.load %arg5[%c0_17, %c0_18] : memref<2x1xf32, #tpu.memory_space<vmem>>, vector<2x1xf32>
      tpu.vector_store %arg5[%c0_17, %c0_18], %27 {strides = array<i32>} : memref<2x1xf32, #tpu.memory_space<vmem>>, vector<2x1xf32>,
      %cst_19 = arith.constant 0.000000e+00 : f32
      %29 = vector.broadcast %cst_19 : f32 to vector<2x1xf32>
      %c0_20 = arith.constant 0 : index
      %c0_21 = arith.constant 0 : index
      %30 = vector.load %arg6[%c0_20, %c0_21] : memref<2x1xf32, #tpu.memory_space<vmem>>, vector<2x1xf32>
      tpu.vector_store %arg6[%c0_20, %c0_21], %29 {strides = array<i32>} : memref<2x1xf32, #tpu.memory_space<vmem>>, vector<2x1xf32>,
    } else {
    }
    %c0 = arith.constant 0 : index
    %c0_1 = arith.constant 0 : index
    %3 = vector.load %arg2[%c0, %c0_1] : memref<2x256xbf16, #tpu.memory_space<vmem>>, vector<2x256xbf16>
    %4 = arith.extf %3 : vector<2x256xbf16> to vector<2x256xf32>
    %c0_2 = arith.constant 0 : index
    %c0_3 = arith.constant 0 : index
    %5 = vector.load %arg3[%c0_2, %c0_3] : memref<2x256xbf16, #tpu.memory_space<vmem>>, vector<2x256xbf16>
    %6 = arith.extf %5 : vector<2x256xbf16> to vector<2x256xf32>
    %7 = arith.negf %6 : vector<2x256xf32>
    %8 = math.exp %7 : vector<2x256xf32>
    %cst = arith.constant 1.000000e+00 : f32
    %9 = vector.broadcast %cst : f32 to vector<2x256xf32>
    %10 = arith.addf %9, %8 : vector<2x256xf32>
    %11 = arith.divf %9, %10 : vector<2x256xf32>
    %c0_4 = arith.constant 0 : index
    %c0_5 = arith.constant 0 : index
    %12 = vector.load %arg5[%c0_4, %c0_5] : memref<2x1xf32, #tpu.memory_space<vmem>>, vector<2x1xf32>
    %13 = arith.mulf %4, %11 : vector<2x256xf32>
    %cst_6 = arith.constant dense<0.000000e+00> : vector<2xf32>
    %14 = vector.multi_reduction <add>, %13, %cst_6 [1] : vector<2x256xf32> to vector<2xf32>
    %15 = vector.shape_cast %14 : vector<2xf32> to vector<2x1xf32>
    %16 = arith.addf %12, %15 : vector<2x1xf32>
    %c0_7 = arith.constant 0 : index
    %c0_8 = arith.constant 0 : index
    %17 = vector.load %arg5[%c0_7, %c0_8] : memref<2x1xf32, #tpu.memory_space<vmem>>, vector<2x1xf32>
    tpu.vector_store %arg5[%c0_7, %c0_8], %16 {strides = array<i32>} : memref<2x1xf32, #tpu.memory_space<vmem>>, vector<2x1xf32>,
    %c0_9 = arith.constant 0 : index
    %c0_10 = arith.constant 0 : index
    %18 = vector.load %arg6[%c0_9, %c0_10] : memref<2x1xf32, #tpu.memory_space<vmem>>, vector<2x1xf32>
    %19 = arith.addf %4, %11 : vector<2x256xf32>
    %cst_11 = arith.constant dense<0.000000e+00> : vector<2xf32>
    %20 = vector.multi_reduction <add>, %19, %cst_11 [1] : vector<2x256xf32> to vector<2xf32>
    %21 = vector.shape_cast %20 : vector<2xf32> to vector<2x1xf32>
    %22 = arith.addf %18, %21 : vector<2x1xf32>
    %c0_12 = arith.constant 0 : index
    %c0_13 = arith.constant 0 : index
    %23 = vector.load %arg6[%c0_12, %c0_13] : memref<2x1xf32, #tpu.memory_space<vmem>>, vector<2x1xf32>
    tpu.vector_store %arg6[%c0_12, %c0_13], %22 {strides = array<i32>} : memref<2x1xf32, #tpu.memory_space<vmem>>, vector<2x1xf32>,
    %c0_i32_14 = arith.constant 0 : i32
    %24 = arith.cmpi eq, %arg1, %c0_i32_14 : i32
    %25 = arith.extui %24 : i1 to i32
    %c0_i32_15 = arith.constant 0 : i32
    %26 = arith.cmpi ne, %25, %c0_i32_15 : i32
    scf.if %26 {
      %c0_16 = arith.constant 0 : index
      %c0_17 = arith.constant 0 : index
      %27 = vector.load %arg5[%c0_16, %c0_17] : memref<2x1xf32, #tpu.memory_space<vmem>>, vector<2x1xf32>
      %cst_18 = arith.constant 2.000000e+00 : f32
      %28 = vector.broadcast %cst_18 : f32 to vector<2x1xf32>
      %29 = arith.mulf %28, %27 : vector<2x1xf32>
      %cst_19 = arith.constant 9.99999997E-7 : f32
      %30 = vector.broadcast %cst_19 : f32 to vector<2x1xf32>
      %31 = arith.addf %29, %30 : vector<2x1xf32>
      %c0_20 = arith.constant 0 : index
      %c0_21 = arith.constant 0 : index
      %32 = vector.load %arg6[%c0_20, %c0_21] : memref<2x1xf32, #tpu.memory_space<vmem>>, vector<2x1xf32>
      %cst_22 = arith.constant 9.99999997E-7 : f32
      %33 = vector.broadcast %cst_22 : f32 to vector<2x1xf32>
      %34 = arith.addf %32, %33 : vector<2x1xf32>
      %35 = arith.divf %31, %34 : vector<2x1xf32>
      %cst_23 = arith.constant 0.000000e+00 : f32
      %cst_24 = arith.constant 1.000000e+00 : f32
      %36 = vector.broadcast %cst_23 : f32 to vector<2x1xf32>
      %37 = arith.maximumf %36, %35 : vector<2x1xf32>
      %38 = vector.broadcast %cst_24 : f32 to vector<2x1xf32>
      %39 = arith.minimumf %38, %37 : vector<2x1xf32>
      %cst_25 = arith.constant 1.000000e+00 : f32
      %40 = vector.broadcast %cst_25 : f32 to vector<2x1xf32>
      %41 = arith.subf %40, %39 : vector<2x1xf32>
      %42 = vector.shape_cast %41 : vector<2x1xf32> to vector<2x1xf32>
      %43 = vector.broadcast %42 : vector<2x1xf32> to vector<2x128xf32>
      %c0_26 = arith.constant 0 : index
      %c0_27 = arith.constant 0 : index
      %44 = vector.load %arg4[%c0_26, %c0_27] : memref<2x128xf32, #tpu.memory_space<vmem>>, vector<2x128xf32>
      tpu.vector_store %arg4[%c0_26, %c0_27], %43 {strides = array<i32>} : memref<2x128xf32, #tpu.memory_space<vmem>>, vector<2x128xf32>,
    } else {
    }
    return
  }
  func.func @transform_0(%arg0: i32, %arg1: i32) -> (i32, i32) {
    %c0_i32 = arith.constant 0 : i32
    return %arg0, %arg1 : i32, i32
  }
  func.func @transform_1(%arg0: i32, %arg1: i32) -> (i32, i32) {
    %c0_i32 = arith.constant 0 : i32
    return %arg0, %arg1 : i32, i32
  }
  func.func @transform_2(%arg0: i32, %arg1: i32) -> (i32, i32) {
    %c0_i32 = arith.constant 0 : i32
    %c0_i32_0 = arith.constant 0 : i32
    return %arg0, %c0_i32 : i32, i32
  }
}

</mosaic_0001>

<llo_original>
// kernel: tpu_custom_call.1
$region0: #{tpu_custom_call.1}
  #allocation0 [shape = 'u32[]', space=smem, size = 0x4, offset = 0x4, fixed_abs, tag = 'smem constant byte address 0x4 - core index']
  #allocation1 [shape = 'u32[144,128]{1,0:T(1,128)}', space=vmem, size = 0x12000, scoped, tag = 'internal scratch']
  #allocation2 [shape = 'f32[2,1]{1,0:T(2,128)}', space=vmem, size = 0x400, scoped, tag = 'scratch operand']
  #allocation3 [shape = 'f32[2,1]{1,0:T(2,128)}', space=vmem, size = 0x400, scoped, tag = 'scratch operand']
  %s0 = inlined_call_operand.hbm [shape: bf16[2,256], index: 0, kind: input, shape index: {}]
  %s1 = inlined_call_operand.vmem [shape: bf16[2,256], index: 1, kind: input, shape index: {}]
  %s2 = inlined_call_operand.hbm [shape: f32[2,128], index: 2, kind: output, shape index: {}]
  %s3 = sld [smem:[#allocation0]]
  $region30: #{tpu_custom_call.1} parent=0
    _
  %s5 = ssub.s32 1, %s3
  %s6 = scalar_select 0, %s5, %s3
  $region1: #{tpu_custom_call.1} parent=0
    #allocation4 [shape = 'u8[1024]{0}', space=vmem, size = 0x400, scoped, tag = 'input window, operand 0, single buffered']
    #allocation5 [shape = 's32[1]{0}', space=sflag, size = 0x4, scoped, tag = 'scoped memory for tpu_custom_call.1']
    #allocation6 [shape = 's32[1]{0}', space=sflag, size = 0x4, scoped, tag = 'scoped memory for tpu_custom_call.1']
    #allocation7 [shape = 'u8[1024]{0}', space=vmem, size = 0x400, scoped, tag = 'output window, operand 0, single buffered']
    %7 = vsyncpa [#allocation5], 0
    %8 = vsyncpa [#allocation6], 0
    // Predicated region
    $region2: #{tpu_custom_call.1} parent=1 // pred_check
      _
    $region3: #{tpu_custom_call.1} parent=1 // pred_check_branch
      %10 = sbr.rel (0) target = $region5
    $region4: #{tpu_custom_call.1} parent=1 // pred_region
      %s12 = ssub.s32 32, 32
      %13 = vsyncadd [#allocation5], %s12
      %s15 = sshll.u32 [#allocation4], 4
      %s16 = int_to_ptr.vmem [resolvable:$true] %s15
      %18 = dma.hbm_to_vmem [thread:$0]  %s0, 32, %s16, [#allocation5]
    $region5: #{tpu_custom_call.1} parent=1 // pred_fallthru
      _
    // Predicated region
    $region6: #{tpu_custom_call.1} parent=1 // pred_check
      _
    $region7: #{tpu_custom_call.1} parent=1 // pred_check_branch
      %20 = sbr.rel (0) target = $region9
    $region8: #{tpu_custom_call.1} parent=1 // pred_region
      _
    $region9: #{tpu_custom_call.1} parent=1 // pred_fallthru
      _
    // Predicated region
    $region10: #{tpu_custom_call.1} parent=1 // pred_check
      _
    $region11: #{tpu_custom_call.1} parent=1 // pred_check_branch
      %22 = sbr.rel (0) target = $region13
    $region12: #{tpu_custom_call.1} parent=1 // pred_region
      %23 = dma.done [#allocation5], 32
    $region13: #{tpu_custom_call.1} parent=1 // pred_fallthru
      _
    %p24 = scmp.eq.s32.totalorder 0, 0
    // Predicated region
    $region14: #{tpu_custom_call.1} parent=1 // pred_check
      %p25 = pneg %p24
    $region15: #{tpu_custom_call.1} parent=1 // pred_check_branch
      %27 = sbr.rel (%p25) target = $region17
    $region16: #{tpu_custom_call.1} parent=1 // pred_region
      %vm28 = vcmask 1024
      %29 = vst.msk [vmem:[#allocation2] sm:$0x3] %vm28, 0.0
      %30 = vst.msk [vmem:[#allocation3] sm:$0x3] %vm28, 0.0
    $region17: #{tpu_custom_call.1} parent=1 // pred_fallthru
      _
    %v31 = vld [vmem:[#allocation4] sm:$0x3]
    %v32 = vunpack.c.l.bf16 %v31
    %v33 = vld [vmem:[%s1] sm:$0x3]
    %v34 = vunpack.c.l.bf16 %v33
    %v35 = vxor.u32 %v34, 2147483648
    %v36 = vmul.f32 %v35, 1.442695
    %v37 = vpow.pop %v36
    %v38 = vadd.f32 %v37, 1.0
    %v39 = vrcp.pop %v38
    %v40 = vmul.f32 1.0, %v39
    %v41 = vld [vmem:[#allocation2] sm:$0x3]
    %v42 = vmul.f32 %v32, %v40
    %v45 = vunpack.c.l.s4 1983009808
    %v46 = vunpack.c.0.s8 %v45
    %v47 = vlaneseq
    %v48 = vshrl.u32 %v47, 7
    %v49 = vsub.s32 %v46, %v48
    %v50 = vrot.slane %v42, %v49
    %v51 = vcombine.high %v50, %v50
    %vm54 = vcmask 1041408
    %v55 = vsel %vm54, %v50, 0.0
    %v56 = vsel %vm54, %v51, 0.0
    %v57 = vadd.f32 %v55, %v56
    %58 = vadd.xlane.f32.xlu0 %v57
    %v59 = vpop.xlane.xlu0 %58
    %v60 = vadd.f32 %v41, %v59
    %vm61 = vcmask 1024
    %62 = vst.msk [vmem:[#allocation2] sm:$0x3] %vm61, %v60
    %v63 = vld [vmem:[#allocation3] sm:$0x3]
    %v64 = vadd.f32 %v32, %v40
    %v67 = vunpack.c.l.s4 1983009808
    %v68 = vunpack.c.0.s8 %v67
    %v69 = vlaneseq
    %v70 = vshrl.u32 %v69, 7
    %v71 = vsub.s32 %v68, %v70
    %v72 = vrot.slane %v64, %v71
    %v73 = vcombine.high %v72, %v72
    %v76 = vsel %vm54, %v72, 0.0
    %v77 = vsel %vm54, %v73, 0.0
    %v78 = vadd.f32 %v76, %v77
    %79 = vadd.xlane.f32.xlu0 %v78
    %v80 = vpop.xlane.xlu0 %79
    %v81 = vadd.f32 %v63, %v80
    %82 = vst.msk [vmem:[#allocation3] sm:$0x3] %vm61, %v81
    // Predicated region
    $region18: #{tpu_custom_call.1} parent=1 // pred_check
      %p83 = pneg %p24
    $region19: #{tpu_custom_call.1} parent=1 // pred_check_branch
      %85 = sbr.rel (%p83) target = $region21
    $region20: #{tpu_custom_call.1} parent=1 // pred_region
      %v86 = vld [vmem:[#allocation2] sm:$0x3]
      %v87 = vmul.f32 %v86, 2.0
      %v88 = vadd.f32 %v87, 1e-06
      %v89 = vld [vmem:[#allocation3] sm:$0x3]
      %v90 = vadd.f32 %v89, 1e-06
      %v91 = vrcp.pop %v90
      %v92 = vmul.f32 %v88, %v91
      %v93 = vmax.f32 %v92, 0.0
      %v94 = vmin.f32 %v93, 1.0
      %v95 = vsub.f32 1.0, %v94
      %97 = vset.pattern.permute.xlu0 0
      %98 = vperm.xlu0 %97, %v95
      %v99 = vpop.permute.xlu0 %98
      %101 = vst [vmem:[#allocation7] sm:$0x3] %v99
    $region21: #{tpu_custom_call.1} parent=1 // pred_fallthru
      _
    // Predicated region
    $region22: #{tpu_custom_call.1} parent=1 // pred_check
      _
    $region23: #{tpu_custom_call.1} parent=1 // pred_check_branch
      %103 = sbr.rel (0) target = $region25
    $region24: #{tpu_custom_call.1} parent=1 // pred_region
      %s105 = ssub.s32 32, 32
      %106 = vsyncadd [#allocation6], %s105
      %s108 = sshll.u32 [#allocation7], 4
      %s109 = int_to_ptr.vmem [resolvable:$true] %s108
      %111 = dma.vmem_to_hbm [thread:$0]  %s109, 32, %s2, [#allocation6]
    $region25: #{tpu_custom_call.1} parent=1 // pred_fallthru
      _
    // Predicated region
    $region26: #{tpu_custom_call.1} parent=1 // pred_check
      _
    $region27: #{tpu_custom_call.1} parent=1 // pred_check_branch
      %113 = sbr.rel (0) target = $region29
    $region28: #{tpu_custom_call.1} parent=1 // pred_region
      %114 = dma.done [#allocation6], 32
    $region29: #{tpu_custom_call.1} parent=1 // pred_fallthru
      _
    %115 = vsyncpa [#allocation5], 1
    %116 = vsyncpa [#allocation6], 1

</llo_original>
